<compile_context>
chip_gen: v5e
topology: v5e:2x2
jax: 0.10.0
libtpu: 0.0.40
codegen_flags: <defaults>
</compile_context>

<pallas_src>
import functools

import jax
import jax.numpy as jnp
import numpy as np
from jax.experimental import pallas as pl
from jax.experimental.pallas import tpu as pltpu


def _round_up(x, m):
    return ((x + m - 1) // m) * m


def _vmem_capacity_bytes():
    """Per-core VMEM capacity; conservative fallback (v7x = 64 MiB) if the query fails."""
    try:
        info = pltpu.get_tpu_info()
        for name in ("vmem_capacity_bytes", "vmem_bytes", "vmem_size_bytes"):
            v = getattr(info, name, None)
            if v:
                return int(v)
    except Exception:
        pass
    return 64 << 20


def _downsample_kernel(xm_ref, xh_ref, w0_ref, w1_ref, shift_ref, o_ref, acc_ref,
                       *, rows, wop):
    """One (batch element, output-row tile) per grid step.

    xm_ref:    (1, rows, Fp)    x_fold rows for output rows [i0, i0+tile_h); flat r = i*wop + j
    xh_ref:    (1, wop, Fp)     halo: the next s-row (s = i0 + tile_h) of x_fold
    w0_ref:    (Fp, Cout_p)     weights for kh in {0,1} (BN scale folded in), fold = (ph, kw, c)
    w1_ref:    (K1p, Cout_p)    weights for kh == 2 (only the ph == 0 slots are nonzero)
    shift_ref: (1, Cout_p)      f32: beta + (conv_bias - running_mean) * scale
    o_ref:     (1, rows, Cout_p) lane-dense flat output slab
    acc_ref:   (rows, Cout_p)   f32 VMEM scratch accumulator
    """
    k1 = w1_ref.shape[0]
    x_main = xm_ref[0]                                          # (rows, Fp)

    # kh in {0, 1}: all six (kh, kw) taps live in the folded feature dim of flat row r itself.
    acc_ref[...] = jnp.dot(x_main, w0_ref[...], preferred_element_type=jnp.float32)

    # kh == 2: the taps of output row i live one s-row below, i.e. flat row r + wop.
    # Accumulate into row-slices of the scratch (no concatenate); slices are wop-aligned.
    if rows > wop:
        acc_ref[:rows - wop, :] += jnp.dot(x_main[wop:, :k1], w1_ref[...],
                                           preferred_element_type=jnp.float32)
    acc_ref[rows - wop:, :] += jnp.dot(xh_ref[0, :, :k1], w1_ref[...],
                                       preferred_element_type=jnp.float32)

    # Fused conv-bias + BatchNorm (eval) shift + ReLU.  Dropout (eval) = identity.
    y = jnp.maximum(acc_ref[...] + shift_ref[...], 0.0)
    o_ref[...] = y.reshape(1, rows, y.shape[-1]).astype(o_ref.dtype)


def _pick_tile_h(Ho, wop, Fp, K1p, Cout_p, itemsize, budget):
    """Largest divisor of Ho whose per-step footprint (incl. all double buffers) fits budget."""
    def footprint(t):
        rows = t * wop
        return (2 * rows * Fp * itemsize           # main input block (double-buffered)
                + 2 * wop * Fp * itemsize          # halo block
                + 2 * Fp * Cout_p * itemsize       # w0 (pipeline double-buffers it too)
                + 2 * K1p * Cout_p * itemsize      # w1
                + 2 * Cout_p * 4                   # shift
                + 2 * rows * Cout_p * itemsize     # output block
                + rows * Cout_p * 4)               # f32 accumulator scratch
    divisors = [t for t in range(1, Ho + 1) if Ho % t == 0]
    fitting = [t for t in divisors if footprint(t) <= budget]
    tile_h = max(fitting) if fitting else 1        # t=1 fallback (rows = wop) always valid
    return tile_h, footprint(tile_h)


@jax.jit
def downsample_block(x_nchw, conv_w, conv_b, bn_gamma, bn_beta, bn_mean, bn_var, eps=1e-5):
    """Forward of DownsampleBlock (eval mode).  Input/Output are NCHW like PyTorch."""
    N, Cin, H, W = x_nchw.shape
    Cout = conv_w.shape[0]
    Ho, Wo = (H + 1) // 2, (W + 1) // 2                        # k=3, s=2, p=1 (odd dims OK)
    dt = x_nchw.dtype
    itemsize = dt.itemsize

    Wop = _round_up(Wo, 8)                                     # sublane-aligned output width
    Cout_p = _round_up(Cout, 128)                              # lane-dense output channels
    F = 6 * Cin                                                # folded (ph, kw, c) contraction
    Fp = _round_up(F, 128)
    K1p = min(Fp, _round_up(3 * Cin, 128))                     # kh==2 only needs the ph==0 half

    # --- glue: zero-pad + width-im2col + space-to-depth (single XLA relayout pass) ---
    # x_fold[n, s*Wop + j, ph*3*Cin + kw*Cin + c] = x_pad[n, c, 2*s + ph, 2*j + kw]
    xp = jnp.pad(x_nchw, ((0, 0), (0, 0), (1, 2 * Ho + 1 - H), (1, 2 * Wop + 1 - W)))
    cols = jnp.stack([xp[:, :, :, kw:kw + 2 * Wop:2] for kw in range(3)], axis=-1)
    cols = cols.reshape(N, Cin, Ho + 1, 2, Wop, 3)             # padded rows -> (s, ph)
    x_fold = jnp.transpose(cols, (0, 2, 4, 3, 5, 1))           # (N, s, j, ph, kw, c)
    x_fold = x_fold.reshape(N, (Ho + 1) * Wop, F)
    x_fold = jnp.pad(x_fold, ((0, 0), (0, 0), (0, Fp - F))).astype(dt)

    # --- glue: parameter folding (BN eval scale -> weights, bias/mean/beta -> shift) ---
    scale = (bn_gamma / jnp.sqrt(bn_var + eps)).astype(jnp.float32)
    shift = ((conv_b - bn_mean) * scale + bn_beta).astype(jnp.float32)
    w = jnp.transpose(conv_w, (2, 3, 1, 0)).astype(jnp.float32) * scale   # (kh, kw, Cin, Cout)
    w0 = w[:2].reshape(6 * Cin, Cout)                          # kh in {0,1}: fold = (ph, kw, c)
    w1 = w[2].reshape(3 * Cin, Cout)                           # kh == 2 (ph == 0 slots)
    w0 = jnp.pad(w0, ((0, Fp - 6 * Cin), (0, Cout_p - Cout))).astype(dt)
    w1 = jnp.pad(w1, ((0, K1p - 3 * Cin), (0, Cout_p - Cout))).astype(dt)
    shift_p = jnp.pad(shift, (0, Cout_p - Cout)).reshape(1, Cout_p)

    # --- per-generation tile sizing (v7x 64 MiB vs v5e/v6e 128 MiB VMEM) ---
    vmem_cap = _vmem_capacity_bytes()
    budget = min((vmem_cap * 3) // 8, 48 << 20)
    tile_h, foot = _pick_tile_h(Ho, Wop, Fp, K1p, Cout_p, itemsize, budget)
    rows = tile_h * Wop
    vmem_limit = int(min(max((vmem_cap * 5) // 8, foot + (8 << 20)), (vmem_cap * 9) // 10))

    kernel = functools.partial(_downsample_kernel, rows=rows, wop=Wop)

    cost = pl.CostEstimate(
        flops=int(2 * N * Ho * Wop * (Fp + K1p) * Cout_p),
        transcendentals=0,
        bytes_accessed=int(x_fold.size * itemsize * (1.0 + 1.0 / tile_h)
                           + (w0.size + w1.size) * itemsize
                           + N * Ho * Wop * Cout_p * itemsize),
    )

    out_flat = pl.pallas_call(
        kernel,
        out_shape=jax.ShapeDtypeStruct((N, Ho * Wop, Cout_p), dt),
        grid_spec=pltpu.PrefetchScalarGridSpec(
            num_scalar_prefetch=0,
            grid=(N, Ho // tile_h),
            in_specs=[
                # main rows of this tile (flat (s, j) rows)
                pl.BlockSpec((1, rows, Fp), lambda n, t: (n, t, 0)),
                # halo: the s-row just below the tile (block units of Wop rows)
                pl.BlockSpec((1, Wop, Fp), lambda n, t: (n, (t + 1) * tile_h, 0)),
                pl.BlockSpec((Fp, Cout_p), lambda n, t: (0, 0)),
                pl.BlockSpec((K1p, Cout_p), lambda n, t: (0, 0)),
                pl.BlockSpec((1, Cout_p), lambda n, t: (0, 0)),
            ],
            out_specs=pl.BlockSpec((1, rows, Cout_p), lambda n, t: (n, t, 0)),
            scratch_shapes=[pltpu.VMEM((rows, Cout_p), jnp.float32)],
        ),
        compiler_params=pltpu.CompilerParams(
            dimension_semantics=("parallel", "parallel"),
            vmem_limit_bytes=vmem_limit),
        cost_estimate=cost,
    )(x_fold, x_fold, w0, w1, shift_p)

    out = out_flat.reshape(N, Ho, Wop, Cout_p)[:, :, :Wo, :Cout]
    return jnp.transpose(out, (0, 3, 1, 2))                    # back to NCHW


def _reference(x_nchw, conv_w, conv_b, bn_gamma, bn_beta, bn_mean, bn_var, eps=1e-5):
    x_nhwc = jnp.transpose(x_nchw, (0, 2, 3, 1))
    w_hwio = jnp.transpose(conv_w, (2, 3, 1, 0))
    conv = jax.lax.conv_general_dilated(
        x_nhwc, w_hwio, window_strides=(2, 2), padding=((1, 1), (1, 1)),
        dimension_numbers=("NHWC", "HWIO", "NHWC"))
    conv = conv + conv_b
    scale = bn_gamma / jnp.sqrt(bn_var + eps)
    y = jnp.maximum((conv - bn_mean) * scale + bn_beta, 0.0)
    return jnp.transpose(y, (0, 3, 1, 2))


if __name__ == "__main__":
    key = jax.random.PRNGKey(0)
    kx, kw, kb, kg, kbt, km, kv = jax.random.split(key, 7)

    N, Cin, H, W = 2, 4, 16, 16
    Cout = 8

    x = jax.random.normal(kx, (N, Cin, H, W), jnp.float32)
    conv_w = 0.1 * jax.random.normal(kw, (Cout, Cin, 3, 3), jnp.float32)
    conv_b = 0.1 * jax.random.normal(kb, (Cout,), jnp.float32)
    bn_gamma = 1.0 + 0.1 * jax.random.normal(kg, (Cout,), jnp.float32)
    bn_beta = 0.1 * jax.random.normal(kbt, (Cout,), jnp.float32)
    bn_mean = 0.1 * jax.random.normal(km, (Cout,), jnp.float32)
    bn_var = jnp.abs(jax.random.normal(kv, (Cout,), jnp.float32)) + 0.5

    out = downsample_block(x, conv_w, conv_b, bn_gamma, bn_beta, bn_mean, bn_var)
    out = jax.block_until_ready(out)

    ref = _reference(x, conv_w, conv_b, bn_gamma, bn_beta, bn_mean, bn_var)
    np.testing.assert_allclose(np.asarray(out), np.asarray(ref), rtol=1e-4, atol=1e-4)
    assert out.shape == (N, Cout, H // 2, W // 2)

    print("KERNEL_OK")
</pallas_src>

<mosaic_0001>
module attributes {stable_mosaic.version = 11 : i64} {
  func.func @_downsample_kernel(%arg0: i32, %arg1: i32, %arg2: memref<1x64x128xf32, #tpu.memory_space<vmem>>, %arg3: memref<1x8x128xf32, #tpu.memory_space<vmem>>, %arg4: memref<128x128xf32, #tpu.memory_space<vmem>>, %arg5: memref<128x128xf32, #tpu.memory_space<vmem>>, %arg6: memref<1x128xf32, #tpu.memory_space<vmem>>, %arg7: memref<1x64x128xf32, #tpu.memory_space<vmem>>, %arg8: memref<64x128xf32, #tpu.memory_space<vmem>>) attributes {dimension_semantics = [#tpu.dimension_semantics<parallel>, #tpu.dimension_semantics<parallel>], iteration_bounds = array<i64: 2, 1>, scalar_prefetch = 0 : i64, scratch_operands = 1 : i64, tpu.core_type = #tpu.core_type<tc>, window_params = [{transform_indices = @transform_0, window_bounds = array<i64: 1, 64, 128>}, {transform_indices = @transform_1, window_bounds = array<i64: 1, 8, 128>}, {pipeline_mode = #tpu.pipeline_mode<synchronous>, transform_indices = @transform_2, window_bounds = array<i64: 128, 128>}, {pipeline_mode = #tpu.pipeline_mode<synchronous>, transform_indices = @transform_3, window_bounds = array<i64: 128, 128>}, {pipeline_mode = #tpu.pipeline_mode<synchronous>, transform_indices = @transform_4, window_bounds = array<i64: 1, 128>}, {transform_indices = @transform_5, window_bounds = array<i64: 1, 64, 128>}]} {
    %c0 = arith.constant 0 : index
    %c0_0 = arith.constant 0 : index
    %c0_1 = arith.constant 0 : index
    %0 = vector.load %arg2[%c0, %c0_0, %c0_1] : memref<1x64x128xf32, #tpu.memory_space<vmem>>, vector<1x64x128xf32>
    %1 = vector.shape_cast %0 : vector<1x64x128xf32> to vector<64x128xf32>
    %c0_2 = arith.constant 0 : index
    %c0_3 = arith.constant 0 : index
    %2 = vector.load %arg4[%c0_2, %c0_3] : memref<128x128xf32, #tpu.memory_space<vmem>>, vector<128x128xf32>
    %cst = arith.constant dense<0.000000e+00> : vector<64x128xf32>
    %3 = tpu.matmul %1, %2, %cst {dimension_numbers = #tpu.dot_dimension_numbers<[1], [0], [0], [1], [0, 0, 1, 1], [], []>} : vector<64x128xf32>, vector<128x128xf32>, vector<64x128xf32> -> vector<64x128xf32>
    %c0_4 = arith.constant 0 : index
    %c0_5 = arith.constant 0 : index
    %4 = vector.load %arg8[%c0_4, %c0_5] : memref<64x128xf32, #tpu.memory_space<vmem>>, vector<64x128xf32>
    tpu.vector_store %arg8[%c0_4, %c0_5], %3 {strides = array<i32>} : memref<64x128xf32, #tpu.memory_space<vmem>>, vector<64x128xf32>,
    %c0_6 = arith.constant 0 : index
    %c0_7 = arith.constant 0 : index
    %5 = vector.load %arg8[%c0_6, %c0_7] : memref<64x128xf32, #tpu.memory_space<vmem>>, vector<56x128xf32>
    %6 = vector.extract_strided_slice %1 {offsets = [8, 0], sizes = [56, 128], strides = [1, 1]} : vector<64x128xf32> to vector<56x128xf32>
    %c0_8 = arith.constant 0 : index
    %c0_9 = arith.constant 0 : index
    %7 = vector.load %arg5[%c0_8, %c0_9] : memref<128x128xf32, #tpu.memory_space<vmem>>, vector<128x128xf32>
    %cst_10 = arith.constant dense<0.000000e+00> : vector<56x128xf32>
    %8 = tpu.matmul %6, %7, %cst_10 {dimension_numbers = #tpu.dot_dimension_numbers<[1], [0], [0], [1], [0, 0, 1, 1], [], []>} : vector<56x128xf32>, vector<128x128xf32>, vector<56x128xf32> -> vector<56x128xf32>
    %9 = arith.addf %5, %8 : vector<56x128xf32>
    %c0_11 = arith.constant 0 : index
    %c0_12 = arith.constant 0 : index
    %10 = vector.load %arg8[%c0_11, %c0_12] : memref<64x128xf32, #tpu.memory_space<vmem>>, vector<56x128xf32>
    tpu.vector_store %arg8[%c0_11, %c0_12], %9 {strides = array<i32>} : memref<64x128xf32, #tpu.memory_space<vmem>>, vector<56x128xf32>,
    %c56 = arith.constant 56 : index
    %c0_13 = arith.constant 0 : index
    %11 = vector.load %arg8[%c56, %c0_13] : memref<64x128xf32, #tpu.memory_space<vmem>>, vector<8x128xf32>
    %c0_14 = arith.constant 0 : index
    %c0_15 = arith.constant 0 : index
    %c0_16 = arith.constant 0 : index
    %12 = vector.load %arg3[%c0_14, %c0_15, %c0_16] : memref<1x8x128xf32, #tpu.memory_space<vmem>>, vector<1x8x128xf32>
    %13 = vector.shape_cast %12 : vector<1x8x128xf32> to vector<8x128xf32>
    %c0_17 = arith.constant 0 : index
    %c0_18 = arith.constant 0 : index
    %14 = vector.load %arg5[%c0_17, %c0_18] : memref<128x128xf32, #tpu.memory_space<vmem>>, vector<128x128xf32>
    %cst_19 = arith.constant dense<0.000000e+00> : vector<8x128xf32>
    %15 = tpu.matmul %13, %14, %cst_19 {dimension_numbers = #tpu.dot_dimension_numbers<[1], [0], [0], [1], [0, 0, 1, 1], [], []>} : vector<8x128xf32>, vector<128x128xf32>, vector<8x128xf32> -> vector<8x128xf32>
    %16 = arith.addf %11, %15 : vector<8x128xf32>
    %c56_20 = arith.constant 56 : index
    %c0_21 = arith.constant 0 : index
    %17 = vector.load %arg8[%c56_20, %c0_21] : memref<64x128xf32, #tpu.memory_space<vmem>>, vector<8x128xf32>
    tpu.vector_store %arg8[%c56_20, %c0_21], %16 {strides = array<i32>} : memref<64x128xf32, #tpu.memory_space<vmem>>, vector<8x128xf32>,
    %c0_22 = arith.constant 0 : index
    %c0_23 = arith.constant 0 : index
    %18 = vector.load %arg8[%c0_22, %c0_23] : memref<64x128xf32, #tpu.memory_space<vmem>>, vector<64x128xf32>
    %c0_24 = arith.constant 0 : index
    %c0_25 = arith.constant 0 : index
    %19 = vector.load %arg6[%c0_24, %c0_25] : memref<1x128xf32, #tpu.memory_space<vmem>>, vector<1x128xf32>
    %20 = vector.broadcast %19 : vector<1x128xf32> to vector<64x128xf32>
    %21 = arith.addf %18, %20 : vector<64x128xf32>
    %cst_26 = arith.constant 0.000000e+00 : f32
    %22 = vector.broadcast %cst_26 : f32 to vector<64x128xf32>
    %23 = arith.maximumf %21, %22 : vector<64x128xf32>
    %24 = vector.shape_cast %23 : vector<64x128xf32> to vector<1x64x128xf32>
    %c0_27 = arith.constant 0 : index
    %c0_28 = arith.constant 0 : index
    %c0_29 = arith.constant 0 : index
    %25 = vector.load %arg7[%c0_27, %c0_28, %c0_29] : memref<1x64x128xf32, #tpu.memory_space<vmem>>, vector<1x64x128xf32>
    tpu.vector_store %arg7[%c0_27, %c0_28, %c0_29], %24 {strides = array<i32>} : memref<1x64x128xf32, #tpu.memory_space<vmem>>, vector<1x64x128xf32>,
    return
  }
  func.func @transform_0(%arg0: i32, %arg1: i32) -> (i32, i32, i32) {
    %c0_i32 = arith.constant 0 : i32
    %c0_i32_0 = arith.constant 0 : i32
    return %arg0, %arg1, %c0_i32 : i32, i32, i32
  }
  func.func @transform_1(%arg0: i32, %arg1: i32) -> (i32, i32, i32) {
    %c1_i32 = arith.constant 1 : i32
    %0 = arith.addi %arg1, %c1_i32 : i32
    %c8_i32 = arith.constant 8 : i32
    %1 = arith.muli %0, %c8_i32 : i32
    %c0_i32 = arith.constant 0 : i32
    %c0_i32_0 = arith.constant 0 : i32
    return %arg0, %1, %c0_i32 : i32, i32, i32
  }
  func.func @transform_2(%arg0: i32, %arg1: i32) -> (i32, i32) {
    %c0_i32 = arith.constant 0 : i32
    %c0_i32_0 = arith.constant 0 : i32
    %c0_i32_1 = arith.constant 0 : i32
    return %c0_i32, %c0_i32_0 : i32, i32
  }
  func.func @transform_3(%arg0: i32, %arg1: i32) -> (i32, i32) {
    %c0_i32 = arith.constant 0 : i32
    %c0_i32_0 = arith.constant 0 : i32
    %c0_i32_1 = arith.constant 0 : i32
    return %c0_i32, %c0_i32_0 : i32, i32
  }
  func.func @transform_4(%arg0: i32, %arg1: i32) -> (i32, i32) {
    %c0_i32 = arith.constant 0 : i32
    %c0_i32_0 = arith.constant 0 : i32
    %c0_i32_1 = arith.constant 0 : i32
    return %c0_i32, %c0_i32_0 : i32, i32
  }
  func.func @transform_5(%arg0: i32, %arg1: i32) -> (i32, i32, i32) {
    %c0_i32 = arith.constant 0 : i32
    %c0_i32_0 = arith.constant 0 : i32
    return %arg0, %arg1, %c0_i32 : i32, i32, i32
  }
}

</mosaic_0001>

<llo_original>
// kernel: squeeze.1
$region0: #{squeeze.1}
  %s0 = inlined_call_operand.vmem [shape: f32[1,3,4,8], index: 0, kind: input, shape index: {}]
  %s1 = inlined_call_operand.vmem [shape: f32[12,8], index: 1, kind: output, shape index: {}]
  $region1: #{squeeze.1} parent=0
    #allocation0 [shape = 'u8[12288]{0}', space=vmem, size = 0x3000, scoped, tag = 'scoped mem for input reshape']
    %s3 = ssub.s32 16, 1
    %s4 = scalar_lea.vmem %s0, 8
    %v5 = vld [vmem:[%s4] sm:%s3]
    %s6 = scalar_lea.vmem [#allocation0], 16
    %7 = vst [vmem:[%s6] sm:%s3] %v5
    %s8 = scalar_lea.vmem %s0, 4
    %v9 = vld [vmem:[%s8] sm:%s3]
    %s10 = scalar_lea.vmem [#allocation0], 8
    %11 = vst [vmem:[%s10] sm:%s3] %v9
    %v12 = vld [vmem:[%s0] sm:%s3]
    %13 = vst [vmem:[#allocation0] sm:%s3] %v12
    %v14 = vld [vmem:[#allocation0] sm:$0xf]
    %vm15 = vcmask 64512
    %16 = vst.msk [vmem:[%s1] sm:$0xf] %vm15, %v14
    %s17 = scalar_lea.vmem [#allocation0], 8
    %v18 = vld [vmem:[%s17] sm:$0xf]
    %vm19 = vcmask 64512
    %s20 = scalar_lea.vmem %s1, 4
    %21 = vst.msk [vmem:[%s20] sm:$0xf] %vm19, %v18
    %s22 = scalar_lea.vmem [#allocation0], 16
    %v23 = vld [vmem:[%s22] sm:$0xf]
    %vm24 = vcmask 64512
    %s25 = scalar_lea.vmem %s1, 8
    %26 = vst.msk [vmem:[%s25] sm:$0xf] %vm24, %v23

// kernel: downsample_block.1
$region0: #{downsample_block.1}
  #allocation0 [shape = 'u32[]', space=smem, size = 0x4, offset = 0x4, fixed_abs, tag = 'smem constant byte address 0x4 - core index']
  #allocation1 [shape = 'u32[72,128]{1,0:T(1,128)}', space=vmem, size = 0x9000, scoped, tag = 'internal scratch']
  #allocation2 [shape = 'f32[64,128]{1,0:T(8,128)}', space=vmem, size = 0x8000, scoped, tag = 'scratch operand']
  %s0 = inlined_call_operand.vmem [shape: f32[2,72,128], index: 0, kind: input, shape index: {}, may-alias: {0,1}]
  %s1 = inlined_call_operand.vmem [shape: f32[2,72,128], index: 1, kind: input, shape index: {}, may-alias: {0,1}]
  %s2 = inlined_call_operand.vmem [shape: f32[128,128], index: 2, kind: input, shape index: {}]
  %s3 = inlined_call_operand.vmem [shape: f32[128,128], index: 3, kind: input, shape index: {}]
  %s4 = inlined_call_operand.vmem [shape: f32[1,128], index: 4, kind: input, shape index: {}]
  %s5 = inlined_call_operand.vmem [shape: f32[2,64,128], index: 5, kind: output, shape index: {}]
  %s6 = sld [smem:[#allocation0]]
  $region53: #{downsample_block.1} parent=0
    _
  %s8 = ssub.s32 1, %s6
  %s9 = scalar_select 0, %s8, %s6
  loop: start=0, step=1, limit=4
  $region2: #{downsample_block.1} parent=0 // loop_pre_header
    _
  $region3: #{downsample_block.1} parent=0 // loop_header
    %s11 = sphi 0, %s15
    %p12 = scmp.ge.s32.totalorder %s11, 4
    %s18 = sphi 0, %s30
    %s19 = sphi 0, %s26
    %s20 = sphi 0, %s18
    %s21 = sphi 0, %s19
    %s22 = sphi 0, %s20
    %s23 = sphi 0, %s21
    %s35 = sphi 0, %s37
    %s38 = sphi 0, %s35
    %s39 = sphi 0, %s38
    %s55 = sphi 0, %s39
    %s67 = sphi 0, %s69
    %s70 = sphi 0, %s67
    %s71 = sphi 0, %s70
    %s87 = sphi 0, %s71
    %s91 = sphi 0, %s91
    %s93 = sphi 0, %s91
    %s94 = sphi 0, %s93
    %s108 = sphi 0, %s94
    %s112 = sphi 0, %s112
    %s114 = sphi 0, %s112
    %s115 = sphi 0, %s114
    %s129 = sphi 0, %s115
    %s133 = sphi 0, %s133
    %s135 = sphi 0, %s133
    %s136 = sphi 0, %s135
    %s150 = sphi 0, %s136
    %s158 = sphi 0, %s160
    %s161 = sphi 0, %s158
    %s162 = sphi 0, %s161
    %s178 = sphi 0, %s162
  $region4: #{downsample_block.1} parent=0 // loop_header_branch
    %14 = sbr.rel (%p12) target = $region8
  $region5: #{downsample_block.1} parent=0 // loop_body
    %s16 = ssub.s32 %s11, 1
    %s17 = ssub.s32 %s11, 2
    %s24 = sadd.s32 1, %s19
    %p25 = scmp.ge.s32.totalorder %s24, 1
    %s26 = scalar_select %p25, 0, %s24
    %s27 = sadd.s32 1, %s18
    %s28 = scalar_select %p25, %s27, %s18
    %p29 = scmp.ge.s32.totalorder %s28, 2
    %s30 = scalar_select %p29, 0, %s28
    %s31 = ssub.s32 %s18, %s30
    %s32 = ssub.s32 %s19, %s26
    %s33 = sor.u32 %s31, %s32
    %p34 = scmp.eq.s32.totalorder %s33, 0
    %s36 = sadd.s32 %s35, 1
    %s37 = scalar_select %p34, %s35, %s36
    %p40 = pneg %p34
    %p41 = scmp.eq.s32.totalorder %s11, 1
    %p42 = por %p40, %p41
    %p43 = scmp.ne.s32.totalorder %s35, %s38
    %p44 = scmp.eq.s32.totalorder %s11, 0
    %p45 = por %p43, %p44
    %p46 = scmp.ne.s32.totalorder %s35, %s38
    %p47 = scmp.eq.s32.totalorder %s16, 1
    %p48 = por %p46, %p47
    %p49 = scmp.ne.s32.totalorder %s38, %s39
    %p50 = scmp.eq.s32.totalorder %s16, 0
    %p51 = por %p49, %p50
    %p52 = scmp.ne.s32.totalorder %s38, %s39
    %p53 = scmp.eq.s32.totalorder %s17, 1
    %p54 = por %p52, %p53
    %p56 = scmp.ne.s32.totalorder %s39, %s55
    %p57 = scmp.eq.s32.totalorder %s17, 0
    %p58 = por %p56, %p57
    %s59 = sadd.s32 %s19, 1
    %s60 = smul.u32 %s59, 8
    %s61 = sadd.s32 %s26, 1
    %s62 = smul.u32 %s61, 8
    %s63 = ssub.s32 %s18, %s30
    %s64 = ssub.s32 %s60, %s62
    %s65 = sor.u32 %s63, %s64
    %p66 = scmp.eq.s32.totalorder %s65, 0
    %s68 = sadd.s32 %s67, 1
    %s69 = scalar_select %p66, %s67, %s68
    %p72 = pneg %p66
    %p73 = scmp.eq.s32.totalorder %s11, 1
    %p74 = por %p72, %p73
    %p75 = scmp.ne.s32.totalorder %s67, %s70
    %p76 = scmp.eq.s32.totalorder %s11, 0
    %p77 = por %p75, %p76
    %p78 = scmp.ne.s32.totalorder %s67, %s70
    %p79 = scmp.eq.s32.totalorder %s16, 1
    %p80 = por %p78, %p79
    %p81 = scmp.ne.s32.totalorder %s70, %s71
    %p82 = scmp.eq.s32.totalorder %s16, 0
    %p83 = por %p81, %p82
    %p84 = scmp.ne.s32.totalorder %s70, %s71
    %p85 = scmp.eq.s32.totalorder %s17, 1
    %p86 = por %p84, %p85
    %p88 = scmp.ne.s32.totalorder %s71, %s87
    %p89 = scmp.eq.s32.totalorder %s17, 0
    %p90 = por %p88, %p89
    %s92 = sadd.s32 %s91, 1
    %p95 = scmp.eq.s32.totalorder %s11, 1
    %p96 = scmp.ne.s32.totalorder %s91, %s93
    %p97 = scmp.eq.s32.totalorder %s11, 0
    %p98 = por %p96, %p97
    %p99 = scmp.ne.s32.totalorder %s91, %s93
    %p100 = scmp.eq.s32.totalorder %s16, 1
    %p101 = por %p99, %p100
    %p102 = scmp.ne.s32.totalorder %s93, %s94
    %p103 = scmp.eq.s32.totalorder %s16, 0
    %p104 = por %p102, %p103
    %p105 = scmp.ne.s32.totalorder %s93, %s94
    %p106 = scmp.eq.s32.totalorder %s17, 1
    %p107 = por %p105, %p106
    %p109 = scmp.ne.s32.totalorder %s94, %s108
    %p110 = scmp.eq.s32.totalorder %s17, 0
    %p111 = por %p109, %p110
    %s113 = sadd.s32 %s112, 1
    %p116 = scmp.eq.s32.totalorder %s11, 1
    %p117 = scmp.ne.s32.totalorder %s112, %s114
    %p118 = scmp.eq.s32.totalorder %s11, 0
    %p119 = por %p117, %p118
    %p120 = scmp.ne.s32.totalorder %s112, %s114
    %p121 = scmp.eq.s32.totalorder %s16, 1
    %p122 = por %p120, %p121
    %p123 = scmp.ne.s32.totalorder %s114, %s115
    %p124 = scmp.eq.s32.totalorder %s16, 0
    %p125 = por %p123, %p124
    %p126 = scmp.ne.s32.totalorder %s114, %s115
    %p127 = scmp.eq.s32.totalorder %s17, 1
    %p128 = por %p126, %p127
    %p130 = scmp.ne.s32.totalorder %s115, %s129
    %p131 = scmp.eq.s32.totalorder %s17, 0
    %p132 = por %p130, %p131
    %s134 = sadd.s32 %s133, 1
    %p137 = scmp.eq.s32.totalorder %s11, 1
    %p138 = scmp.ne.s32.totalorder %s133, %s135
    %p139 = scmp.eq.s32.totalorder %s11, 0
    %p140 = por %p138, %p139
    %p141 = scmp.ne.s32.totalorder %s133, %s135
    %p142 = scmp.eq.s32.totalorder %s16, 1
    %p143 = por %p141, %p142
    %p144 = scmp.ne.s32.totalorder %s135, %s136
    %p145 = scmp.eq.s32.totalorder %s16, 0
    %p146 = por %p144, %p145
    %p147 = scmp.ne.s32.totalorder %s135, %s136
    %p148 = scmp.eq.s32.totalorder %s17, 1
    %p149 = por %p147, %p148
    %p151 = scmp.ne.s32.totalorder %s136, %s150
    %p152 = scmp.eq.s32.totalorder %s17, 0
    %p153 = por %p151, %p152
    %s154 = ssub.s32 %s18, %s30
    %s155 = ssub.s32 %s19, %s26
    %s156 = sor.u32 %s154, %s155
    %p157 = scmp.eq.s32.totalorder %s156, 0
    %s159 = sadd.s32 %s158, 1
    %s160 = scalar_select %p157, %s158, %s159
    %p163 = pneg %p157
    %p164 = scmp.eq.s32.totalorder %s11, 1
    %p165 = por %p163, %p164
    %p166 = scmp.ne.s32.totalorder %s158, %s161
    %p167 = scmp.eq.s32.totalorder %s11, 0
    %p168 = por %p166, %p167
    %p169 = scmp.ne.s32.totalorder %s158, %s161
    %p170 = scmp.eq.s32.totalorder %s16, 1
    %p171 = por %p169, %p170
    %p172 = scmp.ne.s32.totalorder %s161, %s162
    %p173 = scmp.eq.s32.totalorder %s16, 0
    %p174 = por %p172, %p173
    %p175 = scmp.ne.s32.totalorder %s161, %s162
    %p176 = scmp.eq.s32.totalorder %s17, 1
    %p177 = por %p175, %p176
    %p179 = scmp.ne.s32.totalorder %s162, %s178
    %p180 = scmp.eq.s32.totalorder %s17, 0
    %p181 = por %p179, %p180
    %p182 = scmp.le.s32.totalorder 1, %s11
    %p183 = scmp.lt.s32.totalorder %s11, 3
    %p184 = pnand %p182, %p183
    %p185 = pneg %p184
    // Predicated region
    $region9: #{downsample_block.1} parent=5 // pred_check
      _
    $region10: #{downsample_block.1} parent=5 // pred_check_branch
      %187 = sbr.rel (%p184) target = $region12
    $region11: #{downsample_block.1} parent=5 // pred_region
      %s188 = ssub.s32 %s11, 1
      // Predicated region
      $region13: #{downsample_block.1} parent=11 // pred_check
        %p189 = pneg %p104
      $region14: #{downsample_block.1} parent=11 // pred_check_branch
        %191 = sbr.rel (%p189) target = $region16
      $region15: #{downsample_block.1} parent=11 // pred_region
        _
      $region16: #{downsample_block.1} parent=11 // pred_fallthru
        _
      // Predicated region
      $region17: #{downsample_block.1} parent=11 // pred_check
        %p192 = pneg %p125
      $region18: #{downsample_block.1} parent=11 // pred_check_branch
        %194 = sbr.rel (%p192) target = $region20
      $region19: #{downsample_block.1} parent=11 // pred_region
        _
      $region20: #{downsample_block.1} parent=11 // pred_fallthru
        _
      // Predicated region
      $region21: #{downsample_block.1} parent=11 // pred_check
        %p195 = pneg %p146
      $region22: #{downsample_block.1} parent=11 // pred_check_branch
        %197 = sbr.rel (%p195) target = $region24
      $region23: #{downsample_block.1} parent=11 // pred_region
        _
      $region24: #{downsample_block.1} parent=11 // pred_fallthru
        _
    $region12: #{downsample_block.1} parent=5 // pred_fallthru
      _
    %p198 = scmp.lt.s32.totalorder %s11, 2
    // Predicated region
    $region25: #{downsample_block.1} parent=5 // pred_check
      %p199 = pneg %p198
    $region26: #{downsample_block.1} parent=5 // pred_check_branch
      %201 = sbr.rel (%p199) target = $region28
    $region27: #{downsample_block.1} parent=5 // pred_region
      // Predicated region
      $region29: #{downsample_block.1} parent=27 // pred_check
        %p202 = pneg %p45
      $region30: #{downsample_block.1} parent=27 // pred_check_branch
        %204 = sbr.rel (%p202) target = $region32
      $region31: #{downsample_block.1} parent=27 // pred_region
        %s205 = smul.u32 8, %s19
        %s206 = ssub.s32 9, %s205
        %p207 = scmp.lt.s32.totalorder %s206, 8
        %s208 = scalar_select %p207, %s206, 8
        %s209 = smul.u32 8, %s208
        %p210 = scmp.lt.s32.totalorder %s18, 1
        %s211 = scalar_select %p210, %s18, 1
        %p212 = scmp.lt.s32.totalorder %s205, 8
        %s213 = scalar_select %p212, %s205, 8
        %s214 = smul.addr %s211, 9
        %s215 = sadd.s32 %s213, %s214
        %s216 = smul.addr %s215, 8
        %s217 = scalar_lea.vmem %s0, %s216
        %s218 = smul.u32 8, %s19
        %s219 = ssub.s32 9, %s218
        %p220 = scmp.lt.s32.totalorder %s219, 8
        %s221 = scalar_select %p220, %s219, 8
        %s222 = smul.u32 8, %s221
      $region32: #{downsample_block.1} parent=27 // pred_fallthru
        _
      // Predicated region
      $region33: #{downsample_block.1} parent=27 // pred_check
        %p223 = pneg %p77
      $region34: #{downsample_block.1} parent=27 // pred_check_branch
        %225 = sbr.rel (%p223) target = $region36
      $region35: #{downsample_block.1} parent=27 // pred_region
        %s226 = sadd.s32 %s19, 1
        %s227 = smul.u32 %s226, 8
        %p228 = scmp.lt.s32.totalorder %s18, 1
        %s229 = scalar_select %p228, %s18, 1
        %p230 = scmp.lt.s32.totalorder %s227, 8
        %s231 = scalar_select %p230, %s227, 8
        %s232 = smul.addr %s229, 9
        %s233 = sadd.s32 %s231, %s232
        %s234 = smul.addr %s233, 8
        %s235 = scalar_lea.vmem %s1, %s234
        %s236 = sadd.s32 %s19, 1
        %s237 = smul.u32 %s236, 8
      $region36: #{downsample_block.1} parent=27 // pred_fallthru
        _
    $region28: #{downsample_block.1} parent=5 // pred_fallthru
      _
    %p238 = scmp.le.s32.totalorder 1, %s11
    %p239 = scmp.lt.s32.totalorder %s11, 3
    %p240 = pnand %p238, %p239
    %p241 = pneg %p240
    // Predicated region
    $region37: #{downsample_block.1} parent=5 // pred_check
      _
    $region38: #{downsample_block.1} parent=5 // pred_check_branch
      %243 = sbr.rel (%p240) target = $region40
    $region39: #{downsample_block.1} parent=5 // pred_region
      %s244 = ssub.s32 %s11, 1
      %s245 = smul.u32 8, %s21
      %s246 = ssub.s32 9, %s245
      %p247 = scmp.lt.s32.totalorder %s246, 8
      %s248 = scalar_select %p247, %s246, 8
      %s249 = smul.u32 8, %s248
      %p250 = scmp.lt.s32.totalorder %s20, 1
      %s251 = scalar_select %p250, %s20, 1
      %p252 = scmp.lt.s32.totalorder %s245, 8
      %s253 = scalar_select %p252, %s245, 8
      %s254 = smul.addr %s251, 9
      %s255 = sadd.s32 %s253, %s254
      %s256 = smul.addr %s255, 8
      %s257 = scalar_lea.vmem %s0, %s256
      %p258 = pneg %p51
      %p259 = pneg %p48
      %s260 = sadd.s32 %s21, 1
      %s261 = smul.u32 %s260, 8
      %p262 = scmp.lt.s32.totalorder %s20, 1
      %s263 = scalar_select %p262, %s20, 1
      %p264 = scmp.lt.s32.totalorder %s261, 8
      %s265 = scalar_select %p264, %s261, 8
      %s266 = smul.addr %s263, 9
      %s267 = sadd.s32 %s265, %s266
      %s268 = smul.addr %s267, 8
      %s269 = scalar_lea.vmem %s1, %s268
      %p270 = pneg %p83
      %p271 = pneg %p80
      %p272 = pneg %p104
      %p273 = pneg %p101
      %p274 = pneg %p125
      %p275 = pneg %p122
      %p276 = pneg %p146
      %p277 = pneg %p143
      %p278 = pneg %p174
      %p279 = pneg %p171
      %s280 = smul.u32 8, %s21
      %p281 = scmp.lt.s32.totalorder %s20, 1
      %s282 = scalar_select %p281, %s20, 1
      %p283 = scmp.lt.s32.totalorder %s280, 7
      %s284 = scalar_select %p283, %s280, 7
      %s285 = smul.addr %s282, 8
      %s286 = sadd.s32 %s284, %s285
      %s287 = smul.addr %s286, 8
      %s288 = scalar_lea.vmem %s5, %s287
      %s289 = smul.u32 8, %s21
      %s290 = ssub.s32 9, %s289
      %p291 = scmp.lt.s32.totalorder %s290, 8
      %s292 = scalar_select %p291, %s290, 8
      %s293 = smul.u32 8, %s292
      %p294 = scmp.lt.s32.totalorder %s20, 1
      %s295 = scalar_select %p294, %s20, 1
      %p296 = scmp.lt.s32.totalorder %s289, 8
      %s297 = scalar_select %p296, %s289, 8
      %s298 = smul.addr %s295, 9
      %s299 = sadd.s32 %s297, %s298
      %s300 = smul.addr %s299, 8
      %s301 = scalar_lea.vmem %s0, %s300
      %s302 = smul.u32 8, %s21
      %s303 = ssub.s32 9, %s302
      %p304 = scmp.lt.s32.totalorder %s303, 8
      %s305 = scalar_select %p304, %s303, 8
      %s306 = smul.u32 8, %s305
      %s307 = sadd.s32 %s21, 1
      %s308 = smul.u32 %s307, 8
      %p309 = scmp.lt.s32.totalorder %s20, 1
      %s310 = scalar_select %p309, %s20, 1
      %p311 = scmp.lt.s32.totalorder %s308, 8
      %s312 = scalar_select %p311, %s308, 8
      %s313 = smul.addr %s310, 9
      %s314 = sadd.s32 %s312, %s313
      %s315 = smul.addr %s314, 8
      %s316 = scalar_lea.vmem %s1, %s315
      %s317 = sadd.s32 %s21, 1
      %s318 = smul.u32 %s317, 8
      %s319 = smul.u32 8, %s21
      %p320 = scmp.lt.s32.totalorder %s20, 1
      %s321 = scalar_select %p320, %s20, 1
      %p322 = scmp.lt.s32.totalorder %s319, 7
      %s323 = scalar_select %p322, %s319, 7
      %s324 = smul.addr %s321, 8
      %s325 = sadd.s32 %s323, %s324
      %s326 = smul.addr %s325, 8
      %s327 = scalar_lea.vmem %s5, %s326
      %s328 = smul.u32 8, %s21
      %v329 = vld [vmem:[%s301] sm:$0xff]
      %v330 = vld [vmem:[%s301 + $0x8] sm:$0xff]
      %v331 = vld [vmem:[%s301 + $0x10] sm:$0xff]
      %v332 = vld [vmem:[%s301 + $0x18] sm:$0xff]
      %v333 = vld [vmem:[%s301 + $0x20] sm:$0xff]
      %v334 = vld [vmem:[%s301 + $0x28] sm:$0xff]
      %v335 = vld [vmem:[%s301 + $0x30] sm:$0xff]
      %v336 = vld [vmem:[%s301 + $0x38] sm:$0xff]
      %v337 = vld [vmem:[%s2] sm:$0xff]
      %v338 = vld [vmem:[%s2 + $0x8] sm:$0xff]
      %v339 = vld [vmem:[%s2 + $0x10] sm:$0xff]
      %v340 = vld [vmem:[%s2 + $0x18] sm:$0xff]
      %v341 = vld [vmem:[%s2 + $0x20] sm:$0xff]
      %v342 = vld [vmem:[%s2 + $0x28] sm:$0xff]
      %v343 = vld [vmem:[%s2 + $0x30] sm:$0xff]
      %v344 = vld [vmem:[%s2 + $0x38] sm:$0xff]
      %v345 = vld [vmem:[%s2 + $0x40] sm:$0xff]
      %v346 = vld [vmem:[%s2 + $0x48] sm:$0xff]
      %v347 = vld [vmem:[%s2 + $0x50] sm:$0xff]
      %v348 = vld [vmem:[%s2 + $0x58] sm:$0xff]
      %v349 = vld [vmem:[%s2 + $0x60] sm:$0xff]
      %v350 = vld [vmem:[%s2 + $0x68] sm:$0xff]
      %v351 = vld [vmem:[%s2 + $0x70] sm:$0xff]
      %v352 = vld [vmem:[%s2 + $0x78] sm:$0xff]
      %353 = vmatpush.msra.mxu0 %v352
      %354 = vmatpush.msra.mxu0 %v351
      %355 = vmatpush.msra.mxu0 %v350
      %356 = vmatpush.msra.mxu0 %v349
      %357 = vmatpush.msra.mxu0 %v348
      %358 = vmatpush.msra.mxu0 %v347
      %359 = vmatpush.msra.mxu0 %v346
      %360 = vmatpush.msra.mxu0 %v345
      %361 = vmatpush.msra.mxu0 %v344
      %362 = vmatpush.msra.mxu0 %v343
      %363 = vmatpush.msra.mxu0 %v342
      %364 = vmatpush.msra.mxu0 %v341
      %365 = vmatpush.msra.mxu0 %v340
      %366 = vmatpush.msra.mxu0 %v339
      %367 = vmatpush.msra.mxu0 %v338
      %368 = vmatpush.msra.mxu0 %v337
      %369 = vmatmul.f32.gmra.mxu0 %v329
      %v370 = vpop.f32.mrf.mxu0
      %v371 = vadd.f32 0.0, %v370
      %372 = vmatmul.f32.gmra.mxu0 %v330
      %v373 = vpop.f32.mrf.mxu0
      %v374 = vadd.f32 0.0, %v373
      %375 = vmatmul.f32.gmra.mxu0 %v331
      %v376 = vpop.f32.mrf.mxu0
      %v377 = vadd.f32 0.0, %v376
      %378 = vmatmul.f32.gmra.mxu0 %v332
      %v379 = vpop.f32.mrf.mxu0
      %v380 = vadd.f32 0.0, %v379
      %381 = vmatmul.f32.gmra.mxu0 %v333
      %v382 = vpop.f32.mrf.mxu0
      %v383 = vadd.f32 0.0, %v382
      %384 = vmatmul.f32.gmra.mxu0 %v334
      %v385 = vpop.f32.mrf.mxu0
      %v386 = vadd.f32 0.0, %v385
      %387 = vmatmul.f32.gmra.mxu0 %v335
      %v388 = vpop.f32.mrf.mxu0
      %v389 = vadd.f32 0.0, %v388
      %390 = vmatmul.f32.gmra.mxu0 %v336
      %v391 = vpop.f32.mrf.mxu0
      %v392 = vadd.f32 0.0, %v391
      %393 = vdwg.mxu0
      %394 = vst [vmem:[#allocation2] sm:$0xff] %v371
      %395 = vst [vmem:[#allocation2 + $0x8] sm:$0xff] %v374
      %396 = vst [vmem:[#allocation2 + $0x10] sm:$0xff] %v377
      %397 = vst [vmem:[#allocation2 + $0x18] sm:$0xff] %v380
      %398 = vst [vmem:[#allocation2 + $0x20] sm:$0xff] %v383
      %399 = vst [vmem:[#allocation2 + $0x28] sm:$0xff] %v386
      %400 = vst [vmem:[#allocation2 + $0x30] sm:$0xff] %v389
      %401 = vst [vmem:[#allocation2 + $0x38] sm:$0xff] %v392
      %v402 = vld [vmem:[#allocation2] sm:$0xff]
      %v403 = vld [vmem:[#allocation2 + $0x8] sm:$0xff]
      %v404 = vld [vmem:[#allocation2 + $0x10] sm:$0xff]
      %v405 = vld [vmem:[#allocation2 + $0x18] sm:$0xff]
      %v406 = vld [vmem:[#allocation2 + $0x20] sm:$0xff]
      %v407 = vld [vmem:[#allocation2 + $0x28] sm:$0xff]
      %v408 = vld [vmem:[#allocation2 + $0x30] sm:$0xff]
      %v409 = vld [vmem:[%s3] sm:$0xff]
      %v410 = vld [vmem:[%s3 + $0x8] sm:$0xff]
      %v411 = vld [vmem:[%s3 + $0x10] sm:$0xff]
      %v412 = vld [vmem:[%s3 + $0x18] sm:$0xff]
      %v413 = vld [vmem:[%s3 + $0x20] sm:$0xff]
      %v414 = vld [vmem:[%s3 + $0x28] sm:$0xff]
      %v415 = vld [vmem:[%s3 + $0x30] sm:$0xff]
      %v416 = vld [vmem:[%s3 + $0x38] sm:$0xff]
      %v417 = vld [vmem:[%s3 + $0x40] sm:$0xff]
      %v418 = vld [vmem:[%s3 + $0x48] sm:$0xff]
      %v419 = vld [vmem:[%s3 + $0x50] sm:$0xff]
      %v420 = vld [vmem:[%s3 + $0x58] sm:$0xff]
      %v421 = vld [vmem:[%s3 + $0x60] sm:$0xff]
      %v422 = vld [vmem:[%s3 + $0x68] sm:$0xff]
      %v423 = vld [vmem:[%s3 + $0x70] sm:$0xff]
      %v424 = vld [vmem:[%s3 + $0x78] sm:$0xff]
      %425 = vmatpush.msra.mxu0 %v424
      %426 = vmatpush.msra.mxu0 %v423
      %427 = vmatpush.msra.mxu0 %v422
      %428 = vmatpush.msra.mxu0 %v421
      %429 = vmatpush.msra.mxu0 %v420
      %430 = vmatpush.msra.mxu0 %v419
      %431 = vmatpush.msra.mxu0 %v418
      %432 = vmatpush.msra.mxu0 %v417
      %433 = vmatpush.msra.mxu0 %v416
      %434 = vmatpush.msra.mxu0 %v415
      %435 = vmatpush.msra.mxu0 %v414
      %436 = vmatpush.msra.mxu0 %v413
      %437 = vmatpush.msra.mxu0 %v412
      %438 = vmatpush.msra.mxu0 %v411
      %439 = vmatpush.msra.mxu0 %v410
      %440 = vmatpush.msra.mxu0 %v409
      %441 = vmatmul.f32.gmra.mxu0 %v330
      %v442 = vpop.f32.mrf.mxu0
      %v443 = vadd.f32 0.0, %v442
      %444 = vmatmul.f32.gmra.mxu0 %v331
      %v445 = vpop.f32.mrf.mxu0
      %v446 = vadd.f32 0.0, %v445
      %447 = vmatmul.f32.gmra.mxu0 %v332
      %v448 = vpop.f32.mrf.mxu0
      %v449 = vadd.f32 0.0, %v448
      %450 = vmatmul.f32.gmra.mxu0 %v333
      %v451 = vpop.f32.mrf.mxu0
      %v452 = vadd.f32 0.0, %v451
      %453 = vmatmul.f32.gmra.mxu0 %v334
      %v454 = vpop.f32.mrf.mxu0
      %v455 = vadd.f32 0.0, %v454
      %456 = vmatmul.f32.gmra.mxu0 %v335
      %v457 = vpop.f32.mrf.mxu0
      %v458 = vadd.f32 0.0, %v457
      %459 = vmatmul.f32.gmra.mxu0 %v336
      %v460 = vpop.f32.mrf.mxu0
      %v461 = vadd.f32 0.0, %v460
      %462 = vdwg.mxu0
      %v463 = vadd.f32 %v402, %v443
      %v464 = vadd.f32 %v403, %v446
      %v465 = vadd.f32 %v404, %v449
      %v466 = vadd.f32 %v405, %v452
      %v467 = vadd.f32 %v406, %v455
      %v468 = vadd.f32 %v407, %v458
      %v469 = vadd.f32 %v408, %v461
      %470 = vst [vmem:[#allocation2] sm:$0xff] %v463
      %471 = vst [vmem:[#allocation2 + $0x8] sm:$0xff] %v464
      %472 = vst [vmem:[#allocation2 + $0x10] sm:$0xff] %v465
      %473 = vst [vmem:[#allocation2 + $0x18] sm:$0xff] %v466
      %474 = vst [vmem:[#allocation2 + $0x20] sm:$0xff] %v467
      %475 = vst [vmem:[#allocation2 + $0x28] sm:$0xff] %v468
      %476 = vst [vmem:[#allocation2 + $0x30] sm:$0xff] %v469
      %v477 = vld [vmem:[#allocation2 + $0x38] sm:$0xff]
      %v478 = vld [vmem:[%s316] sm:$0xff]
      %v479 = vld [vmem:[%s3] sm:$0xff]
      %v480 = vld [vmem:[%s3 + $0x8] sm:$0xff]
      %v481 = vld [vmem:[%s3 + $0x10] sm:$0xff]
      %v482 = vld [vmem:[%s3 + $0x18] sm:$0xff]
      %v483 = vld [vmem:[%s3 + $0x20] sm:$0xff]
      %v484 = vld [vmem:[%s3 + $0x28] sm:$0xff]
      %v485 = vld [vmem:[%s3 + $0x30] sm:$0xff]
      %v486 = vld [vmem:[%s3 + $0x38] sm:$0xff]
      %v487 = vld [vmem:[%s3 + $0x40] sm:$0xff]
      %v488 = vld [vmem:[%s3 + $0x48] sm:$0xff]
      %v489 = vld [vmem:[%s3 + $0x50] sm:$0xff]
      %v490 = vld [vmem:[%s3 + $0x58] sm:$0xff]
      %v491 = vld [vmem:[%s3 + $0x60] sm:$0xff]
      %v492 = vld [vmem:[%s3 + $0x68] sm:$0xff]
      %v493 = vld [vmem:[%s3 + $0x70] sm:$0xff]
      %v494 = vld [vmem:[%s3 + $0x78] sm:$0xff]
      %495 = vmatpush.msra.mxu0 %v494
      %496 = vmatpush.msra.mxu0 %v493
      %497 = vmatpush.msra.mxu0 %v492
      %498 = vmatpush.msra.mxu0 %v491
      %499 = vmatpush.msra.mxu0 %v490
      %500 = vmatpush.msra.mxu0 %v489
      %501 = vmatpush.msra.mxu0 %v488
      %502 = vmatpush.msra.mxu0 %v487
      %503 = vmatpush.msra.mxu0 %v486
      %504 = vmatpush.msra.mxu0 %v485
      %505 = vmatpush.msra.mxu0 %v484
      %506 = vmatpush.msra.mxu0 %v483
      %507 = vmatpush.msra.mxu0 %v482
      %508 = vmatpush.msra.mxu0 %v481
      %509 = vmatpush.msra.mxu0 %v480
      %510 = vmatpush.msra.mxu0 %v479
      %511 = vmatmul.f32.gmra.mxu0 %v478
      %v512 = vpop.f32.mrf.mxu0
      %v513 = vadd.f32 0.0, %v512
      %514 = vdwg.mxu0
      %v515 = vadd.f32 %v477, %v513
      %516 = vst [vmem:[#allocation2 + $0x38] sm:$0xff] %v515
      %v517 = vld [vmem:[#allocation2] sm:$0xff]
      %v518 = vld [vmem:[#allocation2 + $0x8] sm:$0xff]
      %v519 = vld [vmem:[#allocation2 + $0x10] sm:$0xff]
      %v520 = vld [vmem:[#allocation2 + $0x18] sm:$0xff]
      %v521 = vld [vmem:[#allocation2 + $0x20] sm:$0xff]
      %v522 = vld [vmem:[#allocation2 + $0x28] sm:$0xff]
      %v523 = vld [vmem:[#allocation2 + $0x30] sm:$0xff]
      %v524 = vld [vmem:[#allocation2 + $0x38] sm:$0xff]
      %v525 = vld [vmem:[%s4] sm:$0x1]
      %v527 = vperm.slane %v525, 0
      %v529 = vadd.f32 %v517, %v527
      %v530 = vadd.f32 %v518, %v527
      %v531 = vadd.f32 %v519, %v527
      %v532 = vadd.f32 %v520, %v527
      %v533 = vadd.f32 %v521, %v527
      %v534 = vadd.f32 %v522, %v527
      %v535 = vadd.f32 %v523, %v527
      %v536 = vadd.f32 %v524, %v527
      %v537 = vmax.f32 %v529, 0.0
      %v538 = vmax.f32 %v530, 0.0
      %v539 = vmax.f32 %v531, 0.0
      %v540 = vmax.f32 %v532, 0.0
      %v541 = vmax.f32 %v533, 0.0
      %v542 = vmax.f32 %v534, 0.0
      %v543 = vmax.f32 %v535, 0.0
      %v544 = vmax.f32 %v536, 0.0
      %545 = vst [vmem:[%s327] sm:$0xff] %v537
      %546 = vst [vmem:[%s327 + $0x8] sm:$0xff] %v538
      %547 = vst [vmem:[%s327 + $0x10] sm:$0xff] %v539
      %548 = vst [vmem:[%s327 + $0x18] sm:$0xff] %v540
      %549 = vst [vmem:[%s327 + $0x20] sm:$0xff] %v541
      %550 = vst [vmem:[%s327 + $0x28] sm:$0xff] %v542
      %551 = vst [vmem:[%s327 + $0x30] sm:$0xff] %v543
      %552 = vst [vmem:[%s327 + $0x38] sm:$0xff] %v544
      %s553 = smul.u32 8, %s21
      %p554 = scmp.lt.s32.totalorder %s20, 1
      %s555 = scalar_select %p554, %s20, 1
      %p556 = scmp.lt.s32.totalorder %s553, 7
      %s557 = scalar_select %p556, %s553, 7
      %s558 = smul.addr %s555, 8
      %s559 = sadd.s32 %s557, %s558
      %s560 = smul.addr %s559, 8
      %s561 = scalar_lea.vmem %s5, %s560
      // Predicated region
      $region41: #{downsample_block.1} parent=39 // pred_check
        %p562 = pneg %p171
      $region42: #{downsample_block.1} parent=39 // pred_check_branch
        %564 = sbr.rel (%p562) target = $region44
      $region43: #{downsample_block.1} parent=39 // pred_region
        %s565 = smul.u32 8, %s21
      $region44: #{downsample_block.1} parent=39 // pred_fallthru
        _
    $region40: #{downsample_block.1} parent=5 // pred_fallthru
      _
    %p566 = scmp.le.s32.totalorder 2, %s11
    // Predicated region
    $region45: #{downsample_block.1} parent=5 // pred_check
      %p567 = pneg %p566
    $region46: #{downsample_block.1} parent=5 // pred_check_branch
      %569 = sbr.rel (%p567) target = $region48
    $region47: #{downsample_block.1} parent=5 // pred_region
      %s570 = ssub.s32 %s11, 2
      // Predicated region
      $region49: #{downsample_block.1} parent=47 // pred_check
        %p571 = pneg %p177
      $region50: #{downsample_block.1} parent=47 // pred_check_branch
        %573 = sbr.rel (%p571) target = $region52
      $region51: #{downsample_block.1} parent=47 // pred_region
        %s574 = smul.u32 8, %s23
        %p575 = scmp.lt.s32.totalorder %s22, 1
        %s576 = scalar_select %p575, %s22, 1
        %p577 = scmp.lt.s32.totalorder %s574, 7
        %s578 = scalar_select %p577, %s574, 7
        %s579 = smul.addr %s576, 8
        %s580 = sadd.s32 %s578, %s579
        %s581 = smul.addr %s580, 8
        %s582 = scalar_lea.vmem %s5, %s581
      $region52: #{downsample_block.1} parent=47 // pred_fallthru
        _
    $region48: #{downsample_block.1} parent=5 // pred_fallthru
      _
  $region6: #{downsample_block.1} parent=0 // loop_footer
    %s15 = sadd.s32 1, %s11
  $region7: #{downsample_block.1} parent=0 // loop_footer_branch
    %10 = sbr.rel target = $region3
  $region8: #{downsample_block.1} parent=0 // loop_exit
    _

</llo_original>
